<compile_context>
chip_gen: v7x
topology: tpu7x:2x2x1
jax: 0.10.0
libtpu: 0.0.40
codegen_flags: <defaults>
</compile_context>

<pallas_src>
import jax
import jax.numpy as jnp
from jax.experimental import pallas as pl
from jax.experimental.pallas import tpu as pltpu

K = 5  # conv5x5 kernel size


def _conv5x5_bn_relu_kernel(x_ref, wb_ref, shift_ref, o_ref):
    """One grid step = B_tile images.

    x_ref:     (B_tile, H, W*C_in)       bf16 lane-packed input
    wb_ref:    (K*W*C_in, PAD_OUT)       bf16 banded weight (BN scale folded)
    shift_ref: (1, PAD_OUT)              f32 conv bias + BN shift
    o_ref:     (B_tile, H_out, PAD_OUT)  f32 lane-dense output
    """
    b_tile, _, wc = x_ref.shape
    h_out = o_ref.shape[1]
    x = x_ref[...]
    # im2col over kh only: 5 sublane-shifted row slices concatenated along lanes.
    lhs = jnp.concatenate([x[:, kh:kh + h_out, :] for kh in range(K)], axis=-1)
    lhs = lhs.reshape(b_tile * h_out, K * wc)
    # Single MXU matmul, contraction depth K*W*C_in, f32 accumulation.
    acc = jnp.dot(lhs, wb_ref[...], preferred_element_type=jnp.float32)
    y = jnp.maximum(acc + shift_ref[...], 0.0)          # bias + BN shift, ReLU
    o_ref[...] = y.reshape(b_tile, h_out, -1).astype(o_ref.dtype)


def _fold_params(weight, bias, bn_gamma, bn_beta, bn_mean, bn_var, eps, w, pad_out):
    """Fold conv weight/bias + BN into (banded weight, shift) once per weight set."""
    c_out, c_in = weight.shape[0], weight.shape[1]
    w_out = w - (K - 1)
    out_cols = w_out * c_out

    bn_scale = (bn_gamma / jnp.sqrt(bn_var + eps)).astype(jnp.float32)
    # Fold BN scale into the conv weight: conv(x, w*s) == s * conv(x, w).
    w_scaled = weight.astype(jnp.float32) * bn_scale[:, None, None, None]
    # (C_out, C_in, K, K) -> per kh a (K*C_in, C_out) tap matrix.
    w_flat = jnp.transpose(w_scaled, (2, 3, 1, 0)).reshape(K, K * c_in, c_out)

    # Vectorized banded (Toeplitz) construction — no per-column python loop.
    #   Wb[kh, (c+kw)*C_in + ci, c*C_out + o] = weight[o, ci, kh, kw] * scale[o]
    period = (w + 1) * c_in                       # rows per repeat -> +C_in shift/row
    tile_kh = jnp.concatenate(
        [w_flat, jnp.zeros((K, period - K * c_in, c_out), jnp.float32)], axis=1)
    flat = jnp.tile(tile_kh, (1, w_out, 1))[:, :w_out * w * c_in, :]
    band = flat.reshape(K, w_out, w * c_in, c_out)
    wb = jnp.transpose(band, (0, 2, 1, 3)).reshape(K * w * c_in, out_cols)
    wb = jnp.pad(wb, ((0, 0), (0, pad_out - out_cols))).astype(jnp.bfloat16)

    # Conv bias + BN shift, tiled to the lane-dense output layout, zero-padded.
    shift = (bias.astype(jnp.float32) - bn_mean) * bn_scale + bn_beta
    shift_row = jnp.pad(jnp.tile(shift, w_out), (0, pad_out - out_cols))
    shift_row = shift_row.reshape(1, pad_out).astype(jnp.float32)
    return wb, shift_row


def conv5x5_forward(x_nchw, weight, bias, bn_gamma, bn_beta,
                    bn_mean, bn_var, eps=1e-5):
    """PyTorch-equivalent forward: Conv2d(k=5,s=1,p=0,d=1,bias) -> BN2d -> ReLU.

    x_nchw: (N, C_in, H, W)   weight: (C_out, C_in, 5, 5)   bias: (C_out,)
    returns (N, C_out, H-4, W-4) float32.
    """
    n, c_in, h, w = x_nchw.shape
    c_out = weight.shape[0]
    h_out, w_out = h - (K - 1), w - (K - 1)
    wc = w * c_in
    out_cols = w_out * c_out
    pad_out = ((out_cols + 127) // 128) * 128     # lane-dense (multiple of 128)

    # Lane-packed NCHW -> (N, H, W*C_in), bf16 for the MXU.
    x_packed = jnp.transpose(x_nchw, (0, 2, 3, 1)).reshape(n, h, wc)
    x_packed = x_packed.astype(jnp.bfloat16)

    # NOTE: wb/shift depend only on the weights; in production they would be
    # computed once and cached, not rebuilt per forward call.
    wb, shift_row = _fold_params(weight, bias, bn_gamma, bn_beta, bn_mean,
                                 bn_var, eps, w, pad_out)

    # Batch images per grid step (fills matmul M, amortizes per-step overhead)
    # while keeping >= 2 steps so both v7x TensorCores get work.
    if n >= 2:
        b_tile = max(d for d in range(1, n // 2 + 1) if n % d == 0)
    else:
        b_tile = 1
    grid = (n // b_tile,)

    def build(single_buffer_consts):
        const_kw = (dict(pipeline_mode=pl.Buffered(1))
                    if single_buffer_consts else {})
        return pl.pallas_call(
            _conv5x5_bn_relu_kernel,
            out_shape=jax.ShapeDtypeStruct((n, h_out, pad_out), jnp.float32),
            grid_spec=pltpu.PrefetchScalarGridSpec(
                num_scalar_prefetch=0,
                grid=grid,
                in_specs=[
                    pl.BlockSpec((b_tile, h, wc), lambda b: (b, 0, 0)),
                    pl.BlockSpec((K * wc, pad_out), lambda b: (0, 0),
                                 **const_kw),
                    pl.BlockSpec((1, pad_out), lambda b: (0, 0), **const_kw),
                ],
                out_specs=pl.BlockSpec((b_tile, h_out, pad_out),
                                       lambda b: (b, 0, 0)),
            ),
            compiler_params=pltpu.CompilerParams(
                dimension_semantics=("parallel",)),
        )

    try:
        # Grid-invariant wb/shift: single buffer, no wasted second pipeline buf.
        out_packed = build(True)(x_packed, wb, shift_row)
    except Exception:
        # Fallback if pipeline_mode=pl.Buffered(1) is rejected by this version.
        out_packed = build(False)(x_packed, wb, shift_row)

    # Drop the lane padding, unpack (N, H_out, W_out*C_out) -> NCHW.
    out = out_packed[..., :out_cols].reshape(n, h_out, w_out, c_out)
    return jnp.transpose(out, (0, 3, 1, 2))


def _reference(x_nchw, weight, bias, bn_gamma, bn_beta, bn_mean, bn_var,
               eps=1e-5):
    y = jax.lax.conv_general_dilated(
        x_nchw.astype(jnp.float32), weight.astype(jnp.float32),
        window_strides=(1, 1), padding="VALID",
        dimension_numbers=("NCHW", "OIHW", "NCHW"))
    y = y + bias[None, :, None, None]
    scale = bn_gamma / jnp.sqrt(bn_var + eps)
    y = (y - bn_mean[None, :, None, None]) * scale[None, :, None, None] \
        + bn_beta[None, :, None, None]
    return jnp.maximum(y, 0.0)


if __name__ == "__main__":
    key = jax.random.PRNGKey(0)
    k_x, k_w, k_b, k_g, k_be, k_m, k_v = jax.random.split(key, 7)

    N, C_IN, C_OUT, H, W = 2, 4, 8, 16, 16

    x = jax.random.normal(k_x, (N, C_IN, H, W), jnp.float32)
    weight = jax.random.normal(k_w, (C_OUT, C_IN, K, K), jnp.float32) * 0.1
    bias = jax.random.normal(k_b, (C_OUT,), jnp.float32) * 0.1
    bn_gamma = 1.0 + 0.1 * jax.random.normal(k_g, (C_OUT,), jnp.float32)
    bn_beta = 0.1 * jax.random.normal(k_be, (C_OUT,), jnp.float32)
    bn_mean = 0.1 * jax.random.normal(k_m, (C_OUT,), jnp.float32)
    bn_var = jnp.abs(jax.random.normal(k_v, (C_OUT,), jnp.float32)) + 0.5

    out = conv5x5_forward(x, weight, bias, bn_gamma, bn_beta, bn_mean, bn_var)
    out = jax.block_until_ready(out)

    ref = _reference(x, weight, bias, bn_gamma, bn_beta, bn_mean, bn_var)
    assert out.shape == (N, C_OUT, H - 4, W - 4), out.shape
    # Tolerance covers bf16 MXU inputs (f32 accumulation) vs the f32 reference.
    assert jnp.allclose(out, ref, atol=5e-2, rtol=5e-2), \
        float(jnp.max(jnp.abs(out - ref)))

    print("KERNEL_OK")
</pallas_src>

<mosaic_0001>
module attributes {stable_mosaic.version = 11 : i64} {
  func.func @_conv5x5_bn_relu_kernel(%arg0: i32, %arg1: memref<1x16x64xbf16, #tpu.memory_space<vmem>>, %arg2: memref<320x128xbf16, #tpu.memory_space<vmem>>, %arg3: memref<1x128xf32, #tpu.memory_space<vmem>>, %arg4: memref<1x12x128xf32, #tpu.memory_space<vmem>>) attributes {dimension_semantics = [#tpu.dimension_semantics<parallel>], iteration_bounds = array<i64: 2>, scalar_prefetch = 0 : i64, scratch_operands = 0 : i64, tpu.core_type = #tpu.core_type<tc>, window_params = [{transform_indices = @transform_0, window_bounds = array<i64: 1, 16, 64>}, {pipeline_mode = #tpu.pipeline_mode<synchronous>, transform_indices = @transform_1, window_bounds = array<i64: 320, 128>}, {pipeline_mode = #tpu.pipeline_mode<synchronous>, transform_indices = @transform_2, window_bounds = array<i64: 1, 128>}, {transform_indices = @transform_3, window_bounds = array<i64: 1, 12, 128>}]} {
    %c0 = arith.constant 0 : index
    %c0_0 = arith.constant 0 : index
    %c0_1 = arith.constant 0 : index
    %0 = vector.load %arg1[%c0, %c0_0, %c0_1] : memref<1x16x64xbf16, #tpu.memory_space<vmem>>, vector<1x16x64xbf16>
    %1 = vector.extract_strided_slice %0 {offsets = [0, 0, 0], sizes = [1, 12, 64], strides = [1, 1, 1]} : vector<1x16x64xbf16> to vector<1x12x64xbf16>
    %2 = vector.extract_strided_slice %0 {offsets = [0, 1, 0], sizes = [1, 12, 64], strides = [1, 1, 1]} : vector<1x16x64xbf16> to vector<1x12x64xbf16>
    %3 = vector.extract_strided_slice %0 {offsets = [0, 2, 0], sizes = [1, 12, 64], strides = [1, 1, 1]} : vector<1x16x64xbf16> to vector<1x12x64xbf16>
    %4 = vector.extract_strided_slice %0 {offsets = [0, 3, 0], sizes = [1, 12, 64], strides = [1, 1, 1]} : vector<1x16x64xbf16> to vector<1x12x64xbf16>
    %5 = vector.extract_strided_slice %0 {offsets = [0, 4, 0], sizes = [1, 12, 64], strides = [1, 1, 1]} : vector<1x16x64xbf16> to vector<1x12x64xbf16>
    %6 = tpu.concatenate %1, %2, %3, %4, %5 in 2 : vector<1x12x64xbf16>, vector<1x12x64xbf16>, vector<1x12x64xbf16>, vector<1x12x64xbf16>, vector<1x12x64xbf16> -> vector<1x12x320xbf16>
    %7 = vector.shape_cast %6 : vector<1x12x320xbf16> to vector<12x320xbf16>
    %c0_2 = arith.constant 0 : index
    %c0_3 = arith.constant 0 : index
    %8 = vector.load %arg2[%c0_2, %c0_3] : memref<320x128xbf16, #tpu.memory_space<vmem>>, vector<320x128xbf16>
    %cst = arith.constant dense<0.000000e+00> : vector<12x128xf32>
    %9 = tpu.matmul %7, %8, %cst {dimension_numbers = #tpu.dot_dimension_numbers<[1], [0], [0], [1], [0, 0, 1, 1], [], []>} : vector<12x320xbf16>, vector<320x128xbf16>, vector<12x128xf32> -> vector<12x128xf32>
    %c0_4 = arith.constant 0 : index
    %c0_5 = arith.constant 0 : index
    %10 = vector.load %arg3[%c0_4, %c0_5] : memref<1x128xf32, #tpu.memory_space<vmem>>, vector<1x128xf32>
    %11 = vector.broadcast %10 : vector<1x128xf32> to vector<12x128xf32>
    %12 = arith.addf %9, %11 : vector<12x128xf32>
    %cst_6 = arith.constant 0.000000e+00 : f32
    %13 = vector.broadcast %cst_6 : f32 to vector<12x128xf32>
    %14 = arith.maximumf %12, %13 : vector<12x128xf32>
    %15 = vector.shape_cast %14 : vector<12x128xf32> to vector<1x12x128xf32>
    %c0_7 = arith.constant 0 : index
    %c0_8 = arith.constant 0 : index
    %c0_9 = arith.constant 0 : index
    %16 = vector.load %arg4[%c0_7, %c0_8, %c0_9] : memref<1x12x128xf32, #tpu.memory_space<vmem>>, vector<1x12x128xf32>
    tpu.vector_store %arg4[%c0_7, %c0_8, %c0_9], %15 {strides = array<i32>} : memref<1x12x128xf32, #tpu.memory_space<vmem>>, vector<1x12x128xf32>,
    return
  }
  func.func @transform_0(%arg0: i32) -> (i32, i32, i32) {
    %c0_i32 = arith.constant 0 : i32
    %c0_i32_0 = arith.constant 0 : i32
    %c0_i32_1 = arith.constant 0 : i32
    return %arg0, %c0_i32, %c0_i32_0 : i32, i32, i32
  }
  func.func @transform_1(%arg0: i32) -> (i32, i32) {
    %c0_i32 = arith.constant 0 : i32
    %c0_i32_0 = arith.constant 0 : i32
    %c0_i32_1 = arith.constant 0 : i32
    return %c0_i32, %c0_i32_0 : i32, i32
  }
  func.func @transform_2(%arg0: i32) -> (i32, i32) {
    %c0_i32 = arith.constant 0 : i32
    %c0_i32_0 = arith.constant 0 : i32
    %c0_i32_1 = arith.constant 0 : i32
    return %c0_i32, %c0_i32_0 : i32, i32
  }
  func.func @transform_3(%arg0: i32) -> (i32, i32, i32) {
    %c0_i32 = arith.constant 0 : i32
    %c0_i32_0 = arith.constant 0 : i32
    %c0_i32_1 = arith.constant 0 : i32
    return %arg0, %c0_i32, %c0_i32_0 : i32, i32, i32
  }
}

module attributes {stable_mosaic.version = 11 : i64} {
  func.func @_conv5x5_bn_relu_kernel(%arg0: i32, %arg1: memref<1x16x64xbf16, #tpu.memory_space<vmem>>, %arg2: memref<320x128xbf16, #tpu.memory_space<vmem>>, %arg3: memref<1x128xf32, #tpu.memory_space<vmem>>, %arg4: memref<1x12x128xf32, #tpu.memory_space<vmem>>) attributes {dimension_semantics = [#tpu.dimension_semantics<parallel>], iteration_bounds = array<i64: 2>, scalar_prefetch = 0 : i64, scratch_operands = 0 : i64, tpu.core_type = #tpu.core_type<tc>, window_params = [{transform_indices = @transform_0, window_bounds = array<i64: 1, 16, 64>}, {pipeline_mode = #tpu.pipeline_mode<synchronous>, transform_indices = @transform_1, window_bounds = array<i64: 320, 128>}, {pipeline_mode = #tpu.pipeline_mode<synchronous>, transform_indices = @transform_2, window_bounds = array<i64: 1, 128>}, {transform_indices = @transform_3, window_bounds = array<i64: 1, 12, 128>}]} {
    %c0 = arith.constant 0 : index
    %c0_0 = arith.constant 0 : index
    %c0_1 = arith.constant 0 : index
    %0 = vector.load %arg1[%c0, %c0_0, %c0_1] : memref<1x16x64xbf16, #tpu.memory_space<vmem>>, vector<1x16x64xbf16>
    %1 = vector.extract_strided_slice %0 {offsets = [0, 0, 0], sizes = [1, 12, 64], strides = [1, 1, 1]} : vector<1x16x64xbf16> to vector<1x12x64xbf16>
    %2 = vector.extract_strided_slice %0 {offsets = [0, 1, 0], sizes = [1, 12, 64], strides = [1, 1, 1]} : vector<1x16x64xbf16> to vector<1x12x64xbf16>
    %3 = vector.extract_strided_slice %0 {offsets = [0, 2, 0], sizes = [1, 12, 64], strides = [1, 1, 1]} : vector<1x16x64xbf16> to vector<1x12x64xbf16>
    %4 = vector.extract_strided_slice %0 {offsets = [0, 3, 0], sizes = [1, 12, 64], strides = [1, 1, 1]} : vector<1x16x64xbf16> to vector<1x12x64xbf16>
    %5 = vector.extract_strided_slice %0 {offsets = [0, 4, 0], sizes = [1, 12, 64], strides = [1, 1, 1]} : vector<1x16x64xbf16> to vector<1x12x64xbf16>
    %6 = tpu.concatenate %1, %2, %3, %4, %5 in 2 : vector<1x12x64xbf16>, vector<1x12x64xbf16>, vector<1x12x64xbf16>, vector<1x12x64xbf16>, vector<1x12x64xbf16> -> vector<1x12x320xbf16>
    %7 = vector.shape_cast %6 : vector<1x12x320xbf16> to vector<12x320xbf16>
    %c0_2 = arith.constant 0 : index
    %c0_3 = arith.constant 0 : index
    %8 = vector.load %arg2[%c0_2, %c0_3] : memref<320x128xbf16, #tpu.memory_space<vmem>>, vector<320x128xbf16>
    %cst = arith.constant dense<0.000000e+00> : vector<12x128xf32>
    %9 = tpu.matmul %7, %8, %cst {dimension_numbers = #tpu.dot_dimension_numbers<[1], [0], [0], [1], [0, 0, 1, 1], [], []>} : vector<12x320xbf16>, vector<320x128xbf16>, vector<12x128xf32> -> vector<12x128xf32>
    %c0_4 = arith.constant 0 : index
    %c0_5 = arith.constant 0 : index
    %10 = vector.load %arg3[%c0_4, %c0_5] : memref<1x128xf32, #tpu.memory_space<vmem>>, vector<1x128xf32>
    %11 = vector.broadcast %10 : vector<1x128xf32> to vector<12x128xf32>
    %12 = arith.addf %9, %11 : vector<12x128xf32>
    %cst_6 = arith.constant 0.000000e+00 : f32
    %13 = vector.broadcast %cst_6 : f32 to vector<12x128xf32>
    %14 = arith.maximumf %12, %13 : vector<12x128xf32>
    %15 = vector.shape_cast %14 : vector<12x128xf32> to vector<1x12x128xf32>
    %c0_7 = arith.constant 0 : index
    %c0_8 = arith.constant 0 : index
    %c0_9 = arith.constant 0 : index
    %16 = vector.load %arg4[%c0_7, %c0_8, %c0_9] : memref<1x12x128xf32, #tpu.memory_space<vmem>>, vector<1x12x128xf32>
    tpu.vector_store %arg4[%c0_7, %c0_8, %c0_9], %15 {strides = array<i32>} : memref<1x12x128xf32, #tpu.memory_space<vmem>>, vector<1x12x128xf32>,
    return
  }
  func.func @transform_0(%arg0: i32) -> (i32, i32, i32) {
    %c0_i32 = arith.constant 0 : i32
    %c0_i32_0 = arith.constant 0 : i32
    %c0_i32_1 = arith.constant 0 : i32
    return %arg0, %c0_i32, %c0_i32_0 : i32, i32, i32
  }
  func.func @transform_1(%arg0: i32) -> (i32, i32) {
    %c0_i32 = arith.constant 0 : i32
    %c0_i32_0 = arith.constant 0 : i32
    %c0_i32_1 = arith.constant 0 : i32
    return %c0_i32, %c0_i32_0 : i32, i32
  }
  func.func @transform_2(%arg0: i32) -> (i32, i32) {
    %c0_i32 = arith.constant 0 : i32
    %c0_i32_0 = arith.constant 0 : i32
    %c0_i32_1 = arith.constant 0 : i32
    return %c0_i32, %c0_i32_0 : i32, i32
  }
  func.func @transform_3(%arg0: i32) -> (i32, i32, i32) {
    %c0_i32 = arith.constant 0 : i32
    %c0_i32_0 = arith.constant 0 : i32
    %c0_i32_1 = arith.constant 0 : i32
    return %arg0, %c0_i32, %c0_i32_0 : i32, i32, i32
  }
}

</mosaic_0001>

<llo_original>
// kernel: tpu_custom_call.1
$region0: #{tpu_custom_call.1}
  #allocation0 [shape = 'u32[]', space=smem, size = 0x4, offset = 0x4, fixed_abs, tag = 'smem constant byte address 0x4 - core index']
  #allocation1 [shape = 'u32[144,128]{1,0:T(1,128)}', space=vmem, size = 0x12000, scoped, tag = 'internal scratch']
  %s0 = inlined_call_operand.hbm [shape: bf16[2,16,64], index: 0, kind: input, shape index: {}]
  %s1 = inlined_call_operand.hbm [shape: bf16[320,128], index: 1, kind: input, shape index: {}]
  %s2 = inlined_call_operand.vmem [shape: f32[1,128], index: 2, kind: input, shape index: {}]
  %s3 = inlined_call_operand.vmem [shape: f32[2,12,128], index: 3, kind: output, shape index: {}]
  %s4 = sld [smem:[#allocation0]]
  $region53: #{tpu_custom_call.1} parent=0
    _
  %s6 = ssub.s32 1, %s4
  %s7 = scalar_select 0, %s6, %s4
  $region1: #{tpu_custom_call.1} parent=0
    #allocation2 [shape = 'u8[8192]{0}', space=vmem, size = 0x2000, scoped, tag = 'input window, operand 0']
    #allocation3 [shape = 's32[2]{0}', space=sflag, size = 0x8, scoped, tag = 'scoped memory for tpu_custom_call.1']
    #allocation4 [shape = 'u8[81920]{0}', space=vmem, size = 0x14000, scoped, tag = 'input window, operand 1, single buffered']
    #allocation5 [shape = 's32[1]{0}', space=sflag, size = 0x4, scoped, tag = 'scoped memory for tpu_custom_call.1']
    %8 = vsyncpa [#allocation3], 0
    %s9 = scalar_lea.sflag [#allocation3], 1
    %10 = vsyncpa %s9, 0
    %11 = vsyncpa [#allocation5], 0
    loop: start=0, step=1, limit=4
    $region2: #{tpu_custom_call.1} parent=1 // loop_pre_header
      _
    $region3: #{tpu_custom_call.1} parent=1 // loop_header
      %s13 = sphi 0, %s17
      %p14 = scmp.ge.s32.totalorder %s13, 4
      %s23 = sphi 0, %s25
      %s26 = sphi 0, %s23
      %s27 = sphi 0, %s26
      %s43 = sphi 0, %s27
      %s47 = sphi 0, %s47
      %s49 = sphi 0, %s47
      %s50 = sphi 0, %s49
      %s64 = sphi 0, %s50
      %s68 = sphi 0, %s68
      %s70 = sphi 0, %s68
      %s71 = sphi 0, %s70
      %s85 = sphi 0, %s71
      %s91 = sphi 0, %s93
      %s94 = sphi 0, %s91
      %s95 = sphi 0, %s94
      %s111 = sphi 0, %s95
    $region4: #{tpu_custom_call.1} parent=1 // loop_header_branch
      %16 = sbr.rel (%p14) target = $region8
    $region5: #{tpu_custom_call.1} parent=1 // loop_body
      %s18 = ssub.s32 %s13, 1
      %s19 = ssub.s32 %s13, 2
      %s20 = sadd.s32 %s13, 1
      %s21 = ssub.s32 %s13, %s20
      %p22 = scmp.eq.s32.totalorder %s21, 0
      %s24 = sadd.s32 %s23, 1
      %s25 = scalar_select %p22, %s23, %s24
      %p28 = pneg %p22
      %p29 = scmp.eq.s32.totalorder %s13, 1
      %p30 = por %p28, %p29
      %p31 = scmp.ne.s32.totalorder %s23, %s26
      %p32 = scmp.eq.s32.totalorder %s13, 0
      %p33 = por %p31, %p32
      %p34 = scmp.ne.s32.totalorder %s23, %s26
      %p35 = scmp.eq.s32.totalorder %s18, 1
      %p36 = por %p34, %p35
      %p37 = scmp.ne.s32.totalorder %s26, %s27
      %p38 = scmp.eq.s32.totalorder %s18, 0
      %p39 = por %p37, %p38
      %p40 = scmp.ne.s32.totalorder %s26, %s27
      %p41 = scmp.eq.s32.totalorder %s19, 1
      %p42 = por %p40, %p41
      %p44 = scmp.ne.s32.totalorder %s27, %s43
      %p45 = scmp.eq.s32.totalorder %s19, 0
      %p46 = por %p44, %p45
      %s48 = sadd.s32 %s47, 1
      %p51 = scmp.eq.s32.totalorder %s13, 1
      %p52 = scmp.ne.s32.totalorder %s47, %s49
      %p53 = scmp.eq.s32.totalorder %s13, 0
      %p54 = por %p52, %p53
      %p55 = scmp.ne.s32.totalorder %s47, %s49
      %p56 = scmp.eq.s32.totalorder %s18, 1
      %p57 = por %p55, %p56
      %p58 = scmp.ne.s32.totalorder %s49, %s50
      %p59 = scmp.eq.s32.totalorder %s18, 0
      %p60 = por %p58, %p59
      %p61 = scmp.ne.s32.totalorder %s49, %s50
      %p62 = scmp.eq.s32.totalorder %s19, 1
      %p63 = por %p61, %p62
      %p65 = scmp.ne.s32.totalorder %s50, %s64
      %p66 = scmp.eq.s32.totalorder %s19, 0
      %p67 = por %p65, %p66
      %s69 = sadd.s32 %s68, 1
      %p72 = scmp.eq.s32.totalorder %s13, 1
      %p73 = scmp.ne.s32.totalorder %s68, %s70
      %p74 = scmp.eq.s32.totalorder %s13, 0
      %p75 = por %p73, %p74
      %p76 = scmp.ne.s32.totalorder %s68, %s70
      %p77 = scmp.eq.s32.totalorder %s18, 1
      %p78 = por %p76, %p77
      %p79 = scmp.ne.s32.totalorder %s70, %s71
      %p80 = scmp.eq.s32.totalorder %s18, 0
      %p81 = por %p79, %p80
      %p82 = scmp.ne.s32.totalorder %s70, %s71
      %p83 = scmp.eq.s32.totalorder %s19, 1
      %p84 = por %p82, %p83
      %p86 = scmp.ne.s32.totalorder %s71, %s85
      %p87 = scmp.eq.s32.totalorder %s19, 0
      %p88 = por %p86, %p87
      %s89 = ssub.s32 %s13, %s20
      %p90 = scmp.eq.s32.totalorder %s89, 0
      %s92 = sadd.s32 %s91, 1
      %s93 = scalar_select %p90, %s91, %s92
      %p96 = pneg %p90
      %p97 = scmp.eq.s32.totalorder %s13, 1
      %p98 = por %p96, %p97
      %p99 = scmp.ne.s32.totalorder %s91, %s94
      %p100 = scmp.eq.s32.totalorder %s13, 0
      %p101 = por %p99, %p100
      %p102 = scmp.ne.s32.totalorder %s91, %s94
      %p103 = scmp.eq.s32.totalorder %s18, 1
      %p104 = por %p102, %p103
      %p105 = scmp.ne.s32.totalorder %s94, %s95
      %p106 = scmp.eq.s32.totalorder %s18, 0
      %p107 = por %p105, %p106
      %p108 = scmp.ne.s32.totalorder %s94, %s95
      %p109 = scmp.eq.s32.totalorder %s19, 1
      %p110 = por %p108, %p109
      %p112 = scmp.ne.s32.totalorder %s95, %s111
      %p113 = scmp.eq.s32.totalorder %s19, 0
      %p114 = por %p112, %p113
      %p115 = scmp.le.s32.totalorder 1, %s13
      %p116 = scmp.lt.s32.totalorder %s13, 3
      %p117 = pnand %p115, %p116
      %p118 = pneg %p117
      // Predicated region
      $region9: #{tpu_custom_call.1} parent=5 // pred_check
        _
      $region10: #{tpu_custom_call.1} parent=5 // pred_check_branch
        %120 = sbr.rel (%p117) target = $region12
      $region11: #{tpu_custom_call.1} parent=5 // pred_region
        %s121 = ssub.s32 %s13, 1
        // Predicated region
        $region13: #{tpu_custom_call.1} parent=11 // pred_check
          %p122 = pneg %p60
        $region14: #{tpu_custom_call.1} parent=11 // pred_check_branch
          %124 = sbr.rel (%p122) target = $region16
        $region15: #{tpu_custom_call.1} parent=11 // pred_region
          %s126 = ssub.s32 2560, 2560
          %127 = vsyncadd [#allocation5], %s126
          %s128 = sshll.u32 [#allocation4], 4
          %s129 = int_to_ptr.vmem [resolvable:$true] %s128
          %134 = dma.hbm_to_vmem [thread:$0]  %s1, 2560, %s129, [#allocation5], 64, 64, 4
        $region16: #{tpu_custom_call.1} parent=11 // pred_fallthru
          _
        // Predicated region
        $region17: #{tpu_custom_call.1} parent=11 // pred_check
          %p135 = pneg %p81
        $region18: #{tpu_custom_call.1} parent=11 // pred_check_branch
          %137 = sbr.rel (%p135) target = $region20
        $region19: #{tpu_custom_call.1} parent=11 // pred_region
          _
        $region20: #{tpu_custom_call.1} parent=11 // pred_fallthru
          _
      $region12: #{tpu_custom_call.1} parent=5 // pred_fallthru
        _
      %p138 = scmp.lt.s32.totalorder %s13, 2
      // Predicated region
      $region21: #{tpu_custom_call.1} parent=5 // pred_check
        %p139 = pneg %p138
      $region22: #{tpu_custom_call.1} parent=5 // pred_check_branch
        %141 = sbr.rel (%p139) target = $region24
      $region23: #{tpu_custom_call.1} parent=5 // pred_region
        // Predicated region
        $region25: #{tpu_custom_call.1} parent=23 // pred_check
          %p142 = pneg %p33
        $region26: #{tpu_custom_call.1} parent=23 // pred_check_branch
          %144 = sbr.rel (%p142) target = $region28
        $region27: #{tpu_custom_call.1} parent=23 // pred_region
          %s145 = sand.u32 %s23, 1
          %s146 = scalar_lea.sflag [#allocation3], %s145
          %s147 = sand.u32 %s23, 1
          %s148 = smul.addr %s147, 8
          %s149 = scalar_lea.vmem [#allocation2], %s148
          %s151 = ssub.s32 128, 128
          %152 = vsyncadd %s146, %s151
          %s153 = smul.addr %s13, 2
          %s154 = smul.addr %s153, 64
          %s155 = scalar_lea.hbm %s0, %s154
          %s156 = sshll.u32 %s149, 4
          %s157 = int_to_ptr.vmem [resolvable:$true] %s156
          %162 = dma.hbm_to_vmem [thread:$0]  %s155, 128, %s157, %s146, 64, 64, 4
        $region28: #{tpu_custom_call.1} parent=23 // pred_fallthru
          _
      $region24: #{tpu_custom_call.1} parent=5 // pred_fallthru
        _
      %p163 = scmp.le.s32.totalorder 1, %s13
      %p164 = scmp.lt.s32.totalorder %s13, 3
      %p165 = pnand %p163, %p164
      %p166 = pneg %p165
      // Predicated region
      $region29: #{tpu_custom_call.1} parent=5 // pred_check
        _
      $region30: #{tpu_custom_call.1} parent=5 // pred_check_branch
        %168 = sbr.rel (%p165) target = $region32
      $region31: #{tpu_custom_call.1} parent=5 // pred_region
        %s169 = ssub.s32 %s13, 1
        %s170 = sand.u32 %s26, 1
        %s171 = scalar_lea.sflag [#allocation3], %s170
        %s172 = sand.u32 %s26, 1
        %s173 = smul.addr %s172, 8
        %s174 = scalar_lea.vmem [#allocation2], %s173
        // Predicated region
        $region33: #{tpu_custom_call.1} parent=31 // pred_check
          %p175 = pneg %p39
        $region34: #{tpu_custom_call.1} parent=31 // pred_check_branch
          %177 = sbr.rel (%p175) target = $region36
        $region35: #{tpu_custom_call.1} parent=31 // pred_region
          %178 = dma.done %s171, 128
        $region36: #{tpu_custom_call.1} parent=31 // pred_fallthru
          _
        // Predicated region
        $region37: #{tpu_custom_call.1} parent=31 // pred_check
          %p179 = pneg %p60
        $region38: #{tpu_custom_call.1} parent=31 // pred_check_branch
          %181 = sbr.rel (%p179) target = $region40
        $region39: #{tpu_custom_call.1} parent=31 // pred_region
          %182 = dma.done [#allocation5], 2560
        $region40: #{tpu_custom_call.1} parent=31 // pred_fallthru
          _
        %s183 = sand.u32 %s26, 1
        %s184 = scalar_lea.sflag [#allocation3], %s183
        %s185 = sand.u32 %s26, 1
        %s186 = smul.addr %s185, 8
        %s187 = scalar_lea.vmem [#allocation2], %s186
        %p188 = pneg %p39
        %p189 = pneg %p36
        %p190 = pneg %p60
        %p191 = pneg %p57
        %p192 = pneg %p81
        %p193 = pneg %p78
        %p194 = pneg %p107
        %p195 = pneg %p104
        %p196 = scmp.lt.s32.totalorder %s18, 1
        %s197 = scalar_select %p196, %s18, 1
        %s198 = smul.addr %s197, 2
        %s199 = smul.addr %s198, 8
        %s200 = scalar_lea.vmem %s3, %s199
        %p201 = scmp.lt.s32.totalorder %s18, 1
        %s202 = scalar_select %p201, %s18, 1
        %s203 = smul.addr %s202, 2
        %s204 = smul.addr %s203, 8
        %s205 = scalar_lea.vmem %s3, %s204
        %v207 = vld [vmem:[%s174] sm:$0xf]
        %v208 = vld [vmem:[%s174 + $0x4] sm:$0xf]
        %v211 = vunpack.c.l.b16 %v207
        %v212 = vunpack.c.l.b16 %v208
        %v213 = vpack.c.b16 %v212, %v211
        %v215 = vshrl.u32 %v213, 16
        %v217 = vshll.u32 %v213, 16
        %v219 = vrot.slane %v217, 1
        %v220 = vor.u32 %v215, %v219
        %221 = vrot.lane.b32.xlu0 %v220, 64
        %v222 = vpop.permute.xlu0 %221
        %v223 = vrot.slane %v213, 1
        %v224 = vrot.slane %v215, 1
        %v225 = vrot.slane %v217, 2
        %v226 = vor.u32 %v224, %v225
        %227 = vrot.lane.b32.xlu0 %v226, 64
        %v228 = vpop.permute.xlu0 %227
        %v229 = vrot.slane %v213, 2
        %vm230 = vcmask 523264
        %v232 = vsel %vm230, %v213, %v222
        %v236 = vsel %vm230, %v223, %v228
        %v238 = vld [vmem:[#allocation4] sm:$0xf]
        %v239 = vld [vmem:[#allocation4 + $0x4] sm:$0xf]
        %v240 = vld [vmem:[#allocation4 + $0x8] sm:$0xf]
        %v241 = vld [vmem:[#allocation4 + $0xc] sm:$0xf]
        %v242 = vld [vmem:[#allocation4 + $0x10] sm:$0xf]
        %v243 = vld [vmem:[#allocation4 + $0x14] sm:$0xf]
        %v244 = vld [vmem:[#allocation4 + $0x18] sm:$0xf]
        %v245 = vld [vmem:[#allocation4 + $0x1c] sm:$0xf]
        %v246 = vld [vmem:[#allocation4 + $0x20] sm:$0xf]
        %v247 = vld [vmem:[#allocation4 + $0x24] sm:$0xf]
        %v248 = vld [vmem:[#allocation4 + $0x28] sm:$0xf]
        %v249 = vld [vmem:[#allocation4 + $0x2c] sm:$0xf]
        %v250 = vld [vmem:[#allocation4 + $0x30] sm:$0xf]
        %v251 = vld [vmem:[#allocation4 + $0x34] sm:$0xf]
        %v252 = vld [vmem:[#allocation4 + $0x38] sm:$0xf]
        %v253 = vld [vmem:[#allocation4 + $0x3c] sm:$0xf]
        %v254 = vld [vmem:[#allocation4 + $0x40] sm:$0xf]
        %v255 = vld [vmem:[#allocation4 + $0x44] sm:$0xf]
        %v256 = vld [vmem:[#allocation4 + $0x48] sm:$0xf]
        %v257 = vld [vmem:[#allocation4 + $0x4c] sm:$0xf]
        %v258 = vld [vmem:[#allocation4 + $0x50] sm:$0xf]
        %v259 = vld [vmem:[#allocation4 + $0x54] sm:$0xf]
        %v260 = vld [vmem:[#allocation4 + $0x58] sm:$0xf]
        %v261 = vld [vmem:[#allocation4 + $0x5c] sm:$0xf]
        %v262 = vld [vmem:[#allocation4 + $0x60] sm:$0xf]
        %v263 = vld [vmem:[#allocation4 + $0x64] sm:$0xf]
        %v264 = vld [vmem:[#allocation4 + $0x68] sm:$0xf]
        %v265 = vld [vmem:[#allocation4 + $0x6c] sm:$0xf]
        %v266 = vld [vmem:[#allocation4 + $0x70] sm:$0xf]
        %v267 = vld [vmem:[#allocation4 + $0x74] sm:$0xf]
        %v268 = vld [vmem:[#allocation4 + $0x78] sm:$0xf]
        %v269 = vld [vmem:[#allocation4 + $0x7c] sm:$0xf]
        %v270 = vld [vmem:[#allocation4 + $0x80] sm:$0xf]
        %v271 = vld [vmem:[#allocation4 + $0x84] sm:$0xf]
        %v272 = vld [vmem:[#allocation4 + $0x88] sm:$0xf]
        %v273 = vld [vmem:[#allocation4 + $0x8c] sm:$0xf]
        %v274 = vld [vmem:[#allocation4 + $0x90] sm:$0xf]
        %v275 = vld [vmem:[#allocation4 + $0x94] sm:$0xf]
        %v276 = vld [vmem:[#allocation4 + $0x98] sm:$0xf]
        %v277 = vld [vmem:[#allocation4 + $0x9c] sm:$0xf]
        %v278 = vld [vmem:[%s2] sm:$0x1]
        %v280 = vlaneseq
        %v281 = vshrl.u32 %v280, 7
        %v282 = vsub.s32 0, %v281
        %v283 = vrot.slane %v278, %v282
        %v325 = vunpack.c.l.b16 %v238
        %v326 = vunpack.c.l.b16 %v239
        %v327 = vunpack.c.l.b16 %v240
        %v328 = vunpack.c.l.b16 %v241
        %v329 = vunpack.c.l.b16 %v242
        %v330 = vunpack.c.l.b16 %v243
        %v331 = vunpack.c.l.b16 %v244
        %v332 = vunpack.c.l.b16 %v245
        %v333 = vunpack.c.l.b16 %v246
        %v334 = vunpack.c.l.b16 %v247
        %v335 = vunpack.c.l.b16 %v248
        %v336 = vunpack.c.l.b16 %v249
        %v337 = vunpack.c.l.b16 %v250
        %v338 = vunpack.c.l.b16 %v251
        %v339 = vunpack.c.l.b16 %v252
        %v340 = vunpack.c.l.b16 %v253
        %v341 = vunpack.c.l.b16 %v254
        %v342 = vunpack.c.l.b16 %v255
        %v343 = vunpack.c.l.b16 %v256
        %v344 = vunpack.c.l.b16 %v257
        %v345 = vunpack.c.l.b16 %v258
        %v346 = vunpack.c.l.b16 %v259
        %v347 = vunpack.c.l.b16 %v260
        %v348 = vunpack.c.l.b16 %v261
        %v349 = vunpack.c.l.b16 %v262
        %v350 = vunpack.c.l.b16 %v263
        %v351 = vunpack.c.l.b16 %v264
        %v352 = vunpack.c.l.b16 %v265
        %v353 = vunpack.c.l.b16 %v266
        %v354 = vunpack.c.l.b16 %v267
        %v355 = vunpack.c.l.b16 %v268
        %v356 = vunpack.c.l.b16 %v269
        %v357 = vunpack.c.l.b16 %v270
        %v358 = vunpack.c.l.b16 %v271
        %v359 = vunpack.c.l.b16 %v272
        %v360 = vunpack.c.l.b16 %v273
        %v361 = vunpack.c.l.b16 %v274
        %v362 = vunpack.c.l.b16 %v275
        %v363 = vunpack.c.l.b16 %v276
        %v364 = vunpack.c.l.b16 %v277
        %v365 = vpack.c.b16 %v326, %v325
        %v366 = vpack.c.b16 %v328, %v327
        %v367 = vpack.c.b16 %v330, %v329
        %v368 = vpack.c.b16 %v332, %v331
        %v369 = vpack.c.b16 %v334, %v333
        %v370 = vpack.c.b16 %v336, %v335
        %v371 = vpack.c.b16 %v338, %v337
        %v372 = vpack.c.b16 %v340, %v339
        %v373 = vpack.c.b16 %v342, %v341
        %v374 = vpack.c.b16 %v344, %v343
        %v375 = vpack.c.b16 %v346, %v345
        %v376 = vpack.c.b16 %v348, %v347
        %v377 = vpack.c.b16 %v350, %v349
        %v378 = vpack.c.b16 %v352, %v351
        %v379 = vpack.c.b16 %v354, %v353
        %v380 = vpack.c.b16 %v356, %v355
        %v381 = vpack.c.b16 %v358, %v357
        %v382 = vpack.c.b16 %v360, %v359
        %v383 = vpack.c.b16 %v362, %v361
        %v384 = vpack.c.b16 %v364, %v363
        %v406 = vsel %vm230, %v229, 0
        %408 = vmatprep.subr.bf16.mxu0 0
        %409 = vmatpush1.bf16.msra.mxu0 %v365
        %410 = vmatprep.subr.bf16.mxu0 0
        %411 = vmatpush1.bf16.msra.mxu0 %v366
        %412 = vmatprep.subr.bf16.mxu0 0
        %413 = vmatpush1.bf16.msra.mxu0 %v367
        %414 = vmatprep.subr.bf16.mxu0 0
        %415 = vmatpush1.bf16.msra.mxu0 %v368
        %416 = vmatprep.subr.bf16.mxu0 0
        %417 = vmatpush1.bf16.msra.mxu0 %v369
        %418 = vmatprep.subr.bf16.mxu0 0
        %419 = vmatpush1.bf16.msra.mxu0 %v370
        %420 = vmatprep.subr.bf16.mxu0 0
        %421 = vmatpush1.bf16.msra.mxu0 %v371
        %422 = vmatprep.subr.bf16.mxu0 0
        %423 = vmatpush1.bf16.msra.mxu0 %v372
        %424 = vmatprep.subr.bf16.mxu0 0
        %425 = vmatpush1.bf16.msra.mxu0 %v373
        %426 = vmatprep.subr.bf16.mxu0 0
        %427 = vmatpush1.bf16.msra.mxu0 %v374
        %428 = vmatprep.subr.bf16.mxu0 0
        %429 = vmatpush1.bf16.msra.mxu0 %v375
        %430 = vmatprep.subr.bf16.mxu0 0
        %431 = vmatpush1.bf16.msra.mxu0 %v376
        %432 = vmatprep.subr.bf16.mxu0 0
        %433 = vmatpush1.bf16.msra.mxu0 %v377
        %434 = vmatprep.subr.bf16.mxu0 0
        %435 = vmatpush1.bf16.msra.mxu0 %v378
        %436 = vmatprep.subr.bf16.mxu0 0
        %437 = vmatpush1.bf16.msra.mxu0 %v379
        %438 = vmatprep.subr.bf16.mxu0 0
        %439 = vmatpush1.bf16.msra.mxu0 %v380
        %440 = vmatprep.mubr.bf16.mxu0 %v236
        %441 = vmatmul.mubr.bf16.gmra.mrb[0].mxu0 %v232
        %v442 = vpop.f32.mrb[0].mxu0
        %v443 = vadd.f32 %v283, %v442
        %v444 = vpop.f32.mrb[0].mxu0
        %v445 = vpop.f32.mrb[0].mxu0
        %v446 = vadd.f32 %v283, %v445
        %v447 = vpop.f32.mrb[0].mxu0
        %448 = vdwg.mxu0
        %449 = vmatprep.subr.bf16.mxu0 0
        %450 = vmatpush1.bf16.msra.mxu0 %v381
        %451 = vmatprep.subr.bf16.mxu0 0
        %452 = vmatpush1.bf16.msra.mxu0 %v382
        %453 = vmatprep.subr.bf16.mxu0 0
        %454 = vmatpush1.bf16.msra.mxu0 %v383
        %455 = vmatprep.subr.bf16.mxu0 0
        %456 = vmatpush1.bf16.msra.mxu0 %v384
        %457 = vmatprep.subr.bf16.mxu0 0
        %458 = vmatpush1.bf16.msra.mxu0 0
        %459 = vmatprep.subr.bf16.mxu0 0
        %460 = vmatpush1.bf16.msra.mxu0 0
        %461 = vmatprep.subr.bf16.mxu0 0
        %462 = vmatpush1.bf16.msra.mxu0 0
        %463 = vmatprep.subr.bf16.mxu0 0
        %464 = vmatpush1.bf16.msra.mxu0 0
        %465 = vmatprep.subr.bf16.mxu0 0
        %466 = vmatpush1.bf16.msra.mxu0 0
        %467 = vmatprep.subr.bf16.mxu0 0
        %468 = vmatpush1.bf16.msra.mxu0 0
        %469 = vmatprep.subr.bf16.mxu0 0
        %470 = vmatpush1.bf16.msra.mxu0 0
        %471 = vmatprep.subr.bf16.mxu0 0
        %472 = vmatpush1.bf16.msra.mxu0 0
        %473 = vmatprep.subr.bf16.mxu0 0
        %474 = vmatpush1.bf16.msra.mxu0 0
        %475 = vmatprep.subr.bf16.mxu0 0
        %476 = vmatpush1.bf16.msra.mxu0 0
        %477 = vmatprep.subr.bf16.mxu0 0
        %478 = vmatpush1.bf16.msra.mxu0 0
        %479 = vmatprep.subr.bf16.mxu0 0
        %480 = vmatpush1.bf16.msra.mxu0 0
        %481 = vmatprep.mubr.bf16.mxu0 0
        %482 = vmatmul.mubr.bf16.gmra.mrb[0].mxu0 %v406
        %v483 = vpop.f32.mrb[0].mxu0
        %v484 = vadd.f32 %v443, %v483
        %v485 = vpop.f32.mrb[0].mxu0
        %v486 = vpop.f32.mrb[0].mxu0
        %v487 = vadd.f32 %v446, %v486
        %v488 = vpop.f32.mrb[0].mxu0
        %489 = vdwg.mxu0
        %v490 = vmax.f32 %v484, 0.0
        %v491 = vmax.f32 %v487, 0.0
        %492 = vst [vmem:[%s205] sm:$0xff] %v490
        %493 = vst [vmem:[%s205 + $0x8] sm:$0xf] %v491
        %p494 = scmp.lt.s32.totalorder %s18, 1
        %s495 = scalar_select %p494, %s18, 1
        %s496 = smul.addr %s495, 2
        %s497 = smul.addr %s496, 8
        %s498 = scalar_lea.vmem %s3, %s497
        // Predicated region
        $region41: #{tpu_custom_call.1} parent=31 // pred_check
          %p499 = pneg %p104
        $region42: #{tpu_custom_call.1} parent=31 // pred_check_branch
          %501 = sbr.rel (%p499) target = $region44
        $region43: #{tpu_custom_call.1} parent=31 // pred_region
          _
        $region44: #{tpu_custom_call.1} parent=31 // pred_fallthru
          _
      $region32: #{tpu_custom_call.1} parent=5 // pred_fallthru
        _
      %p502 = scmp.le.s32.totalorder 2, %s13
      // Predicated region
      $region45: #{tpu_custom_call.1} parent=5 // pred_check
        %p503 = pneg %p502
      $region46: #{tpu_custom_call.1} parent=5 // pred_check_branch
        %505 = sbr.rel (%p503) target = $region48
      $region47: #{tpu_custom_call.1} parent=5 // pred_region
        %s506 = ssub.s32 %s13, 2
        // Predicated region
        $region49: #{tpu_custom_call.1} parent=47 // pred_check
          %p507 = pneg %p110
        $region50: #{tpu_custom_call.1} parent=47 // pred_check_branch
          %509 = sbr.rel (%p507) target = $region52
        $region51: #{tpu_custom_call.1} parent=47 // pred_region
          %p510 = scmp.lt.s32.totalorder %s19, 1
          %s511 = scalar_select %p510, %s19, 1
          %s512 = smul.addr %s511, 2
          %s513 = smul.addr %s512, 8
          %s514 = scalar_lea.vmem %s3, %s513
        $region52: #{tpu_custom_call.1} parent=47 // pred_fallthru
          _
      $region48: #{tpu_custom_call.1} parent=5 // pred_fallthru
        _
    $region6: #{tpu_custom_call.1} parent=1 // loop_footer
      %s17 = sadd.s32 1, %s13
    $region7: #{tpu_custom_call.1} parent=1 // loop_footer_branch
      %12 = sbr.rel target = $region3
    $region8: #{tpu_custom_call.1} parent=1 // loop_exit
      _
    %515 = vsyncpa [#allocation3], 1
    %s516 = scalar_lea.sflag [#allocation3], 1
    %517 = vsyncpa %s516, 1
    %518 = vsyncpa [#allocation5], 1

// kernel: tpu_custom_call.1
$region0: #{tpu_custom_call.1}
  #allocation0 [shape = 'u32[]', space=smem, size = 0x4, offset = 0x4, fixed_abs, tag = 'smem constant byte address 0x4 - core index']
  #allocation1 [shape = 'u32[144,128]{1,0:T(1,128)}', space=vmem, size = 0x12000, scoped, tag = 'internal scratch']
  %s0 = inlined_call_operand.hbm [shape: bf16[2,16,64], index: 0, kind: input, shape index: {}]
  %s1 = inlined_call_operand.hbm [shape: bf16[320,128], index: 1, kind: input, shape index: {}]
  %s2 = inlined_call_operand.vmem [shape: f32[1,128], index: 2, kind: input, shape index: {}]
  %s3 = inlined_call_operand.vmem [shape: f32[2,12,128], index: 3, kind: output, shape index: {}]
  %s4 = sld [smem:[#allocation0]]
  $region53: #{tpu_custom_call.1} parent=0
    _
  %s6 = ssub.s32 1, %s4
  %s7 = scalar_select 0, %s6, %s4
  $region1: #{tpu_custom_call.1} parent=0
    #allocation2 [shape = 'u8[8192]{0}', space=vmem, size = 0x2000, scoped, tag = 'input window, operand 0']
    #allocation3 [shape = 's32[2]{0}', space=sflag, size = 0x8, scoped, tag = 'scoped memory for tpu_custom_call.1']
    #allocation4 [shape = 'u8[81920]{0}', space=vmem, size = 0x14000, scoped, tag = 'input window, operand 1, single buffered']
    #allocation5 [shape = 's32[1]{0}', space=sflag, size = 0x4, scoped, tag = 'scoped memory for tpu_custom_call.1']
    %8 = vsyncpa [#allocation3], 0
    %s9 = scalar_lea.sflag [#allocation3], 1
    %10 = vsyncpa %s9, 0
    %11 = vsyncpa [#allocation5], 0
    loop: start=0, step=1, limit=4
    $region2: #{tpu_custom_call.1} parent=1 // loop_pre_header
      _
    $region3: #{tpu_custom_call.1} parent=1 // loop_header
      %s13 = sphi 0, %s17
      %p14 = scmp.ge.s32.totalorder %s13, 4
      %s23 = sphi 0, %s25
      %s26 = sphi 0, %s23
      %s27 = sphi 0, %s26
      %s43 = sphi 0, %s27
      %s47 = sphi 0, %s47
      %s49 = sphi 0, %s47
      %s50 = sphi 0, %s49
      %s64 = sphi 0, %s50
      %s68 = sphi 0, %s68
      %s70 = sphi 0, %s68
      %s71 = sphi 0, %s70
      %s85 = sphi 0, %s71
      %s91 = sphi 0, %s93
      %s94 = sphi 0, %s91
      %s95 = sphi 0, %s94
      %s111 = sphi 0, %s95
    $region4: #{tpu_custom_call.1} parent=1 // loop_header_branch
      %16 = sbr.rel (%p14) target = $region8
    $region5: #{tpu_custom_call.1} parent=1 // loop_body
      %s18 = ssub.s32 %s13, 1
      %s19 = ssub.s32 %s13, 2
      %s20 = sadd.s32 %s13, 1
      %s21 = ssub.s32 %s13, %s20
      %p22 = scmp.eq.s32.totalorder %s21, 0
      %s24 = sadd.s32 %s23, 1
      %s25 = scalar_select %p22, %s23, %s24
      %p28 = pneg %p22
      %p29 = scmp.eq.s32.totalorder %s13, 1
      %p30 = por %p28, %p29
      %p31 = scmp.ne.s32.totalorder %s23, %s26
      %p32 = scmp.eq.s32.totalorder %s13, 0
      %p33 = por %p31, %p32
      %p34 = scmp.ne.s32.totalorder %s23, %s26
      %p35 = scmp.eq.s32.totalorder %s18, 1
      %p36 = por %p34, %p35
      %p37 = scmp.ne.s32.totalorder %s26, %s27
      %p38 = scmp.eq.s32.totalorder %s18, 0
      %p39 = por %p37, %p38
      %p40 = scmp.ne.s32.totalorder %s26, %s27
      %p41 = scmp.eq.s32.totalorder %s19, 1
      %p42 = por %p40, %p41
      %p44 = scmp.ne.s32.totalorder %s27, %s43
      %p45 = scmp.eq.s32.totalorder %s19, 0
      %p46 = por %p44, %p45
      %s48 = sadd.s32 %s47, 1
      %p51 = scmp.eq.s32.totalorder %s13, 1
      %p52 = scmp.ne.s32.totalorder %s47, %s49
      %p53 = scmp.eq.s32.totalorder %s13, 0
      %p54 = por %p52, %p53
      %p55 = scmp.ne.s32.totalorder %s47, %s49
      %p56 = scmp.eq.s32.totalorder %s18, 1
      %p57 = por %p55, %p56
      %p58 = scmp.ne.s32.totalorder %s49, %s50
      %p59 = scmp.eq.s32.totalorder %s18, 0
      %p60 = por %p58, %p59
      %p61 = scmp.ne.s32.totalorder %s49, %s50
      %p62 = scmp.eq.s32.totalorder %s19, 1
      %p63 = por %p61, %p62
      %p65 = scmp.ne.s32.totalorder %s50, %s64
      %p66 = scmp.eq.s32.totalorder %s19, 0
      %p67 = por %p65, %p66
      %s69 = sadd.s32 %s68, 1
      %p72 = scmp.eq.s32.totalorder %s13, 1
      %p73 = scmp.ne.s32.totalorder %s68, %s70
      %p74 = scmp.eq.s32.totalorder %s13, 0
      %p75 = por %p73, %p74
      %p76 = scmp.ne.s32.totalorder %s68, %s70
      %p77 = scmp.eq.s32.totalorder %s18, 1
      %p78 = por %p76, %p77
      %p79 = scmp.ne.s32.totalorder %s70, %s71
      %p80 = scmp.eq.s32.totalorder %s18, 0
      %p81 = por %p79, %p80
      %p82 = scmp.ne.s32.totalorder %s70, %s71
      %p83 = scmp.eq.s32.totalorder %s19, 1
      %p84 = por %p82, %p83
      %p86 = scmp.ne.s32.totalorder %s71, %s85
      %p87 = scmp.eq.s32.totalorder %s19, 0
      %p88 = por %p86, %p87
      %s89 = ssub.s32 %s13, %s20
      %p90 = scmp.eq.s32.totalorder %s89, 0
      %s92 = sadd.s32 %s91, 1
      %s93 = scalar_select %p90, %s91, %s92
      %p96 = pneg %p90
      %p97 = scmp.eq.s32.totalorder %s13, 1
      %p98 = por %p96, %p97
      %p99 = scmp.ne.s32.totalorder %s91, %s94
      %p100 = scmp.eq.s32.totalorder %s13, 0
      %p101 = por %p99, %p100
      %p102 = scmp.ne.s32.totalorder %s91, %s94
      %p103 = scmp.eq.s32.totalorder %s18, 1
      %p104 = por %p102, %p103
      %p105 = scmp.ne.s32.totalorder %s94, %s95
      %p106 = scmp.eq.s32.totalorder %s18, 0
      %p107 = por %p105, %p106
      %p108 = scmp.ne.s32.totalorder %s94, %s95
      %p109 = scmp.eq.s32.totalorder %s19, 1
      %p110 = por %p108, %p109
      %p112 = scmp.ne.s32.totalorder %s95, %s111
      %p113 = scmp.eq.s32.totalorder %s19, 0
      %p114 = por %p112, %p113
      %p115 = scmp.le.s32.totalorder 1, %s13
      %p116 = scmp.lt.s32.totalorder %s13, 3
      %p117 = pnand %p115, %p116
      %p118 = pneg %p117
      // Predicated region
      $region9: #{tpu_custom_call.1} parent=5 // pred_check
        _
      $region10: #{tpu_custom_call.1} parent=5 // pred_check_branch
        %120 = sbr.rel (%p117) target = $region12
      $region11: #{tpu_custom_call.1} parent=5 // pred_region
        %s121 = ssub.s32 %s13, 1
        // Predicated region
        $region13: #{tpu_custom_call.1} parent=11 // pred_check
          %p122 = pneg %p60
        $region14: #{tpu_custom_call.1} parent=11 // pred_check_branch
          %124 = sbr.rel (%p122) target = $region16
        $region15: #{tpu_custom_call.1} parent=11 // pred_region
          %s126 = ssub.s32 2560, 2560
          %127 = vsyncadd [#allocation5], %s126
          %s128 = sshll.u32 [#allocation4], 4
          %s129 = int_to_ptr.vmem [resolvable:$true] %s128
          %134 = dma.hbm_to_vmem [thread:$0]  %s1, 2560, %s129, [#allocation5], 64, 64, 4
        $region16: #{tpu_custom_call.1} parent=11 // pred_fallthru
          _
        // Predicated region
        $region17: #{tpu_custom_call.1} parent=11 // pred_check
          %p135 = pneg %p81
        $region18: #{tpu_custom_call.1} parent=11 // pred_check_branch
          %137 = sbr.rel (%p135) target = $region20
        $region19: #{tpu_custom_call.1} parent=11 // pred_region
          _
        $region20: #{tpu_custom_call.1} parent=11 // pred_fallthru
          _
      $region12: #{tpu_custom_call.1} parent=5 // pred_fallthru
        _
      %p138 = scmp.lt.s32.totalorder %s13, 2
      // Predicated region
      $region21: #{tpu_custom_call.1} parent=5 // pred_check
        %p139 = pneg %p138
      $region22: #{tpu_custom_call.1} parent=5 // pred_check_branch
        %141 = sbr.rel (%p139) target = $region24
      $region23: #{tpu_custom_call.1} parent=5 // pred_region
        // Predicated region
        $region25: #{tpu_custom_call.1} parent=23 // pred_check
          %p142 = pneg %p33
        $region26: #{tpu_custom_call.1} parent=23 // pred_check_branch
          %144 = sbr.rel (%p142) target = $region28
        $region27: #{tpu_custom_call.1} parent=23 // pred_region
          %s145 = sand.u32 %s23, 1
          %s146 = scalar_lea.sflag [#allocation3], %s145
          %s147 = sand.u32 %s23, 1
          %s148 = smul.addr %s147, 8
          %s149 = scalar_lea.vmem [#allocation2], %s148
          %s151 = ssub.s32 128, 128
          %152 = vsyncadd %s146, %s151
          %s153 = smul.addr %s13, 2
          %s154 = smul.addr %s153, 64
          %s155 = scalar_lea.hbm %s0, %s154
          %s156 = sshll.u32 %s149, 4
          %s157 = int_to_ptr.vmem [resolvable:$true] %s156
          %162 = dma.hbm_to_vmem [thread:$0]  %s155, 128, %s157, %s146, 64, 64, 4
        $region28: #{tpu_custom_call.1} parent=23 // pred_fallthru
          _
      $region24: #{tpu_custom_call.1} parent=5 // pred_fallthru
        _
      %p163 = scmp.le.s32.totalorder 1, %s13
      %p164 = scmp.lt.s32.totalorder %s13, 3
      %p165 = pnand %p163, %p164
      %p166 = pneg %p165
      // Predicated region
      $region29: #{tpu_custom_call.1} parent=5 // pred_check
        _
      $region30: #{tpu_custom_call.1} parent=5 // pred_check_branch
        %168 = sbr.rel (%p165) target = $region32
      $region31: #{tpu_custom_call.1} parent=5 // pred_region
        %s169 = ssub.s32 %s13, 1
        %s170 = sand.u32 %s26, 1
        %s171 = scalar_lea.sflag [#allocation3], %s170
        %s172 = sand.u32 %s26, 1
        %s173 = smul.addr %s172, 8
        %s174 = scalar_lea.vmem [#allocation2], %s173
        // Predicated region
        $region33: #{tpu_custom_call.1} parent=31 // pred_check
          %p175 = pneg %p39
        $region34: #{tpu_custom_call.1} parent=31 // pred_check_branch
          %177 = sbr.rel (%p175) target = $region36
        $region35: #{tpu_custom_call.1} parent=31 // pred_region
          %178 = dma.done %s171, 128
        $region36: #{tpu_custom_call.1} parent=31 // pred_fallthru
          _
        // Predicated region
        $region37: #{tpu_custom_call.1} parent=31 // pred_check
          %p179 = pneg %p60
        $region38: #{tpu_custom_call.1} parent=31 // pred_check_branch
          %181 = sbr.rel (%p179) target = $region40
        $region39: #{tpu_custom_call.1} parent=31 // pred_region
          %182 = dma.done [#allocation5], 2560
        $region40: #{tpu_custom_call.1} parent=31 // pred_fallthru
          _
        %s183 = sand.u32 %s26, 1
        %s184 = scalar_lea.sflag [#allocation3], %s183
        %s185 = sand.u32 %s26, 1
        %s186 = smul.addr %s185, 8
        %s187 = scalar_lea.vmem [#allocation2], %s186
        %p188 = pneg %p39
        %p189 = pneg %p36
        %p190 = pneg %p60
        %p191 = pneg %p57
        %p192 = pneg %p81
        %p193 = pneg %p78
        %p194 = pneg %p107
        %p195 = pneg %p104
        %p196 = scmp.lt.s32.totalorder %s18, 1
        %s197 = scalar_select %p196, %s18, 1
        %s198 = smul.addr %s197, 2
        %s199 = smul.addr %s198, 8
        %s200 = scalar_lea.vmem %s3, %s199
        %p201 = scmp.lt.s32.totalorder %s18, 1
        %s202 = scalar_select %p201, %s18, 1
        %s203 = smul.addr %s202, 2
        %s204 = smul.addr %s203, 8
        %s205 = scalar_lea.vmem %s3, %s204
        %v207 = vld [vmem:[%s174] sm:$0xf]
        %v208 = vld [vmem:[%s174 + $0x4] sm:$0xf]
        %v211 = vunpack.c.l.b16 %v207
        %v212 = vunpack.c.l.b16 %v208
        %v213 = vpack.c.b16 %v212, %v211
        %v215 = vshrl.u32 %v213, 16
        %v217 = vshll.u32 %v213, 16
        %v219 = vrot.slane %v217, 1
        %v220 = vor.u32 %v215, %v219
        %221 = vrot.lane.b32.xlu0 %v220, 64
        %v222 = vpop.permute.xlu0 %221
        %v223 = vrot.slane %v213, 1
        %v224 = vrot.slane %v215, 1
        %v225 = vrot.slane %v217, 2
        %v226 = vor.u32 %v224, %v225
        %227 = vrot.lane.b32.xlu0 %v226, 64
        %v228 = vpop.permute.xlu0 %227
        %v229 = vrot.slane %v213, 2
        %vm230 = vcmask 523264
        %v232 = vsel %vm230, %v213, %v222
        %v236 = vsel %vm230, %v223, %v228
        %v238 = vld [vmem:[#allocation4] sm:$0xf]
        %v239 = vld [vmem:[#allocation4 + $0x4] sm:$0xf]
        %v240 = vld [vmem:[#allocation4 + $0x8] sm:$0xf]
        %v241 = vld [vmem:[#allocation4 + $0xc] sm:$0xf]
        %v242 = vld [vmem:[#allocation4 + $0x10] sm:$0xf]
        %v243 = vld [vmem:[#allocation4 + $0x14] sm:$0xf]
        %v244 = vld [vmem:[#allocation4 + $0x18] sm:$0xf]
        %v245 = vld [vmem:[#allocation4 + $0x1c] sm:$0xf]
        %v246 = vld [vmem:[#allocation4 + $0x20] sm:$0xf]
        %v247 = vld [vmem:[#allocation4 + $0x24] sm:$0xf]
        %v248 = vld [vmem:[#allocation4 + $0x28] sm:$0xf]
        %v249 = vld [vmem:[#allocation4 + $0x2c] sm:$0xf]
        %v250 = vld [vmem:[#allocation4 + $0x30] sm:$0xf]
        %v251 = vld [vmem:[#allocation4 + $0x34] sm:$0xf]
        %v252 = vld [vmem:[#allocation4 + $0x38] sm:$0xf]
        %v253 = vld [vmem:[#allocation4 + $0x3c] sm:$0xf]
        %v254 = vld [vmem:[#allocation4 + $0x40] sm:$0xf]
        %v255 = vld [vmem:[#allocation4 + $0x44] sm:$0xf]
        %v256 = vld [vmem:[#allocation4 + $0x48] sm:$0xf]
        %v257 = vld [vmem:[#allocation4 + $0x4c] sm:$0xf]
        %v258 = vld [vmem:[#allocation4 + $0x50] sm:$0xf]
        %v259 = vld [vmem:[#allocation4 + $0x54] sm:$0xf]
        %v260 = vld [vmem:[#allocation4 + $0x58] sm:$0xf]
        %v261 = vld [vmem:[#allocation4 + $0x5c] sm:$0xf]
        %v262 = vld [vmem:[#allocation4 + $0x60] sm:$0xf]
        %v263 = vld [vmem:[#allocation4 + $0x64] sm:$0xf]
        %v264 = vld [vmem:[#allocation4 + $0x68] sm:$0xf]
        %v265 = vld [vmem:[#allocation4 + $0x6c] sm:$0xf]
        %v266 = vld [vmem:[#allocation4 + $0x70] sm:$0xf]
        %v267 = vld [vmem:[#allocation4 + $0x74] sm:$0xf]
        %v268 = vld [vmem:[#allocation4 + $0x78] sm:$0xf]
        %v269 = vld [vmem:[#allocation4 + $0x7c] sm:$0xf]
        %v270 = vld [vmem:[#allocation4 + $0x80] sm:$0xf]
        %v271 = vld [vmem:[#allocation4 + $0x84] sm:$0xf]
        %v272 = vld [vmem:[#allocation4 + $0x88] sm:$0xf]
        %v273 = vld [vmem:[#allocation4 + $0x8c] sm:$0xf]
        %v274 = vld [vmem:[#allocation4 + $0x90] sm:$0xf]
        %v275 = vld [vmem:[#allocation4 + $0x94] sm:$0xf]
        %v276 = vld [vmem:[#allocation4 + $0x98] sm:$0xf]
        %v277 = vld [vmem:[#allocation4 + $0x9c] sm:$0xf]
        %v278 = vld [vmem:[%s2] sm:$0x1]
        %v280 = vlaneseq
        %v281 = vshrl.u32 %v280, 7
        %v282 = vsub.s32 0, %v281
        %v283 = vrot.slane %v278, %v282
        %v325 = vunpack.c.l.b16 %v238
        %v326 = vunpack.c.l.b16 %v239
        %v327 = vunpack.c.l.b16 %v240
        %v328 = vunpack.c.l.b16 %v241
        %v329 = vunpack.c.l.b16 %v242
        %v330 = vunpack.c.l.b16 %v243
        %v331 = vunpack.c.l.b16 %v244
        %v332 = vunpack.c.l.b16 %v245
        %v333 = vunpack.c.l.b16 %v246
        %v334 = vunpack.c.l.b16 %v247
        %v335 = vunpack.c.l.b16 %v248
        %v336 = vunpack.c.l.b16 %v249
        %v337 = vunpack.c.l.b16 %v250
        %v338 = vunpack.c.l.b16 %v251
        %v339 = vunpack.c.l.b16 %v252
        %v340 = vunpack.c.l.b16 %v253
        %v341 = vunpack.c.l.b16 %v254
        %v342 = vunpack.c.l.b16 %v255
        %v343 = vunpack.c.l.b16 %v256
        %v344 = vunpack.c.l.b16 %v257
        %v345 = vunpack.c.l.b16 %v258
        %v346 = vunpack.c.l.b16 %v259
        %v347 = vunpack.c.l.b16 %v260
        %v348 = vunpack.c.l.b16 %v261
        %v349 = vunpack.c.l.b16 %v262
        %v350 = vunpack.c.l.b16 %v263
        %v351 = vunpack.c.l.b16 %v264
        %v352 = vunpack.c.l.b16 %v265
        %v353 = vunpack.c.l.b16 %v266
        %v354 = vunpack.c.l.b16 %v267
        %v355 = vunpack.c.l.b16 %v268
        %v356 = vunpack.c.l.b16 %v269
        %v357 = vunpack.c.l.b16 %v270
        %v358 = vunpack.c.l.b16 %v271
        %v359 = vunpack.c.l.b16 %v272
        %v360 = vunpack.c.l.b16 %v273
        %v361 = vunpack.c.l.b16 %v274
        %v362 = vunpack.c.l.b16 %v275
        %v363 = vunpack.c.l.b16 %v276
        %v364 = vunpack.c.l.b16 %v277
        %v365 = vpack.c.b16 %v326, %v325
        %v366 = vpack.c.b16 %v328, %v327
        %v367 = vpack.c.b16 %v330, %v329
        %v368 = vpack.c.b16 %v332, %v331
        %v369 = vpack.c.b16 %v334, %v333
        %v370 = vpack.c.b16 %v336, %v335
        %v371 = vpack.c.b16 %v338, %v337
        %v372 = vpack.c.b16 %v340, %v339
        %v373 = vpack.c.b16 %v342, %v341
        %v374 = vpack.c.b16 %v344, %v343
        %v375 = vpack.c.b16 %v346, %v345
        %v376 = vpack.c.b16 %v348, %v347
        %v377 = vpack.c.b16 %v350, %v349
        %v378 = vpack.c.b16 %v352, %v351
        %v379 = vpack.c.b16 %v354, %v353
        %v380 = vpack.c.b16 %v356, %v355
        %v381 = vpack.c.b16 %v358, %v357
        %v382 = vpack.c.b16 %v360, %v359
        %v383 = vpack.c.b16 %v362, %v361
        %v384 = vpack.c.b16 %v364, %v363
        %v406 = vsel %vm230, %v229, 0
        %408 = vmatprep.subr.bf16.mxu0 0
        %409 = vmatpush1.bf16.msra.mxu0 %v365
        %410 = vmatprep.subr.bf16.mxu0 0
        %411 = vmatpush1.bf16.msra.mxu0 %v366
        %412 = vmatprep.subr.bf16.mxu0 0
        %413 = vmatpush1.bf16.msra.mxu0 %v367
        %414 = vmatprep.subr.bf16.mxu0 0
        %415 = vmatpush1.bf16.msra.mxu0 %v368
        %416 = vmatprep.subr.bf16.mxu0 0
        %417 = vmatpush1.bf16.msra.mxu0 %v369
        %418 = vmatprep.subr.bf16.mxu0 0
        %419 = vmatpush1.bf16.msra.mxu0 %v370
        %420 = vmatprep.subr.bf16.mxu0 0
        %421 = vmatpush1.bf16.msra.mxu0 %v371
        %422 = vmatprep.subr.bf16.mxu0 0
        %423 = vmatpush1.bf16.msra.mxu0 %v372
        %424 = vmatprep.subr.bf16.mxu0 0
        %425 = vmatpush1.bf16.msra.mxu0 %v373
        %426 = vmatprep.subr.bf16.mxu0 0
        %427 = vmatpush1.bf16.msra.mxu0 %v374
        %428 = vmatprep.subr.bf16.mxu0 0
        %429 = vmatpush1.bf16.msra.mxu0 %v375
        %430 = vmatprep.subr.bf16.mxu0 0
        %431 = vmatpush1.bf16.msra.mxu0 %v376
        %432 = vmatprep.subr.bf16.mxu0 0
        %433 = vmatpush1.bf16.msra.mxu0 %v377
        %434 = vmatprep.subr.bf16.mxu0 0
        %435 = vmatpush1.bf16.msra.mxu0 %v378
        %436 = vmatprep.subr.bf16.mxu0 0
        %437 = vmatpush1.bf16.msra.mxu0 %v379
        %438 = vmatprep.subr.bf16.mxu0 0
        %439 = vmatpush1.bf16.msra.mxu0 %v380
        %440 = vmatprep.mubr.bf16.mxu0 %v236
        %441 = vmatmul.mubr.bf16.gmra.mrb[0].mxu0 %v232
        %v442 = vpop.f32.mrb[0].mxu0
        %v443 = vadd.f32 %v283, %v442
        %v444 = vpop.f32.mrb[0].mxu0
        %v445 = vpop.f32.mrb[0].mxu0
        %v446 = vadd.f32 %v283, %v445
        %v447 = vpop.f32.mrb[0].mxu0
        %448 = vdwg.mxu0
        %449 = vmatprep.subr.bf16.mxu0 0
        %450 = vmatpush1.bf16.msra.mxu0 %v381
        %451 = vmatprep.subr.bf16.mxu0 0
        %452 = vmatpush1.bf16.msra.mxu0 %v382
        %453 = vmatprep.subr.bf16.mxu0 0
        %454 = vmatpush1.bf16.msra.mxu0 %v383
        %455 = vmatprep.subr.bf16.mxu0 0
        %456 = vmatpush1.bf16.msra.mxu0 %v384
        %457 = vmatprep.subr.bf16.mxu0 0
        %458 = vmatpush1.bf16.msra.mxu0 0
        %459 = vmatprep.subr.bf16.mxu0 0
        %460 = vmatpush1.bf16.msra.mxu0 0
        %461 = vmatprep.subr.bf16.mxu0 0
        %462 = vmatpush1.bf16.msra.mxu0 0
        %463 = vmatprep.subr.bf16.mxu0 0
        %464 = vmatpush1.bf16.msra.mxu0 0
        %465 = vmatprep.subr.bf16.mxu0 0
        %466 = vmatpush1.bf16.msra.mxu0 0
        %467 = vmatprep.subr.bf16.mxu0 0
        %468 = vmatpush1.bf16.msra.mxu0 0
        %469 = vmatprep.subr.bf16.mxu0 0
        %470 = vmatpush1.bf16.msra.mxu0 0
        %471 = vmatprep.subr.bf16.mxu0 0
        %472 = vmatpush1.bf16.msra.mxu0 0
        %473 = vmatprep.subr.bf16.mxu0 0
        %474 = vmatpush1.bf16.msra.mxu0 0
        %475 = vmatprep.subr.bf16.mxu0 0
        %476 = vmatpush1.bf16.msra.mxu0 0
        %477 = vmatprep.subr.bf16.mxu0 0
        %478 = vmatpush1.bf16.msra.mxu0 0
        %479 = vmatprep.subr.bf16.mxu0 0
        %480 = vmatpush1.bf16.msra.mxu0 0
        %481 = vmatprep.mubr.bf16.mxu0 0
        %482 = vmatmul.mubr.bf16.gmra.mrb[0].mxu0 %v406
        %v483 = vpop.f32.mrb[0].mxu0
        %v484 = vadd.f32 %v443, %v483
        %v485 = vpop.f32.mrb[0].mxu0
        %v486 = vpop.f32.mrb[0].mxu0
        %v487 = vadd.f32 %v446, %v486
        %v488 = vpop.f32.mrb[0].mxu0
        %489 = vdwg.mxu0
        %v490 = vmax.f32 %v484, 0.0
        %v491 = vmax.f32 %v487, 0.0
        %492 = vst [vmem:[%s205] sm:$0xff] %v490
        %493 = vst [vmem:[%s205 + $0x8] sm:$0xf] %v491
        %p494 = scmp.lt.s32.totalorder %s18, 1
        %s495 = scalar_select %p494, %s18, 1
        %s496 = smul.addr %s495, 2
        %s497 = smul.addr %s496, 8
        %s498 = scalar_lea.vmem %s3, %s497
        // Predicated region
        $region41: #{tpu_custom_call.1} parent=31 // pred_check
          %p499 = pneg %p104
        $region42: #{tpu_custom_call.1} parent=31 // pred_check_branch
          %501 = sbr.rel (%p499) target = $region44
        $region43: #{tpu_custom_call.1} parent=31 // pred_region
          _
        $region44: #{tpu_custom_call.1} parent=31 // pred_fallthru
          _
      $region32: #{tpu_custom_call.1} parent=5 // pred_fallthru
        _
      %p502 = scmp.le.s32.totalorder 2, %s13
      // Predicated region
      $region45: #{tpu_custom_call.1} parent=5 // pred_check
        %p503 = pneg %p502
      $region46: #{tpu_custom_call.1} parent=5 // pred_check_branch
        %505 = sbr.rel (%p503) target = $region48
      $region47: #{tpu_custom_call.1} parent=5 // pred_region
        %s506 = ssub.s32 %s13, 2
        // Predicated region
        $region49: #{tpu_custom_call.1} parent=47 // pred_check
          %p507 = pneg %p110
        $region50: #{tpu_custom_call.1} parent=47 // pred_check_branch
          %509 = sbr.rel (%p507) target = $region52
        $region51: #{tpu_custom_call.1} parent=47 // pred_region
          %p510 = scmp.lt.s32.totalorder %s19, 1
          %s511 = scalar_select %p510, %s19, 1
          %s512 = smul.addr %s511, 2
          %s513 = smul.addr %s512, 8
          %s514 = scalar_lea.vmem %s3, %s513
        $region52: #{tpu_custom_call.1} parent=47 // pred_fallthru
          _
      $region48: #{tpu_custom_call.1} parent=5 // pred_fallthru
        _
    $region6: #{tpu_custom_call.1} parent=1 // loop_footer
      %s17 = sadd.s32 1, %s13
    $region7: #{tpu_custom_call.1} parent=1 // loop_footer_branch
      %12 = sbr.rel target = $region3
    $region8: #{tpu_custom_call.1} parent=1 // loop_exit
      _
    %515 = vsyncpa [#allocation3], 1
    %s516 = scalar_lea.sflag [#allocation3], 1
    %517 = vsyncpa %s516, 1
    %518 = vsyncpa [#allocation5], 1

</llo_original>
